<compile_context>
chip_gen: v6e
topology: v6e:2x2x1
jax: 0.10.0
libtpu: 0.0.40
codegen_flags: <defaults>
</compile_context>

<pallas_src>
import math
import jax
import jax.numpy as jnp
from jax.experimental import pallas as pl
from jax.experimental.pallas import tpu as pltpu

LANE = 128  # TPU lane width; all feature dims are padded to a multiple of this.


def _round_up(v, m):
    return ((v + m - 1) // m) * m


def qnetwork_kernel(x_ref,
                    w1_ref, b1_ref,
                    w2_ref, b2_ref,
                    w3_ref, b3_ref,
                    w4_ref, b4_ref,
                    out_ref):
    """One batch tile of the MLP: 3x (bf16 matmul + f32 bias + ReLU) + final layer."""
    # x tile is already bf16 (cast in the wrapper to halve its DMA bytes).
    h = jnp.dot(x_ref[...], w1_ref[...], preferred_element_type=jnp.float32)
    h = jnp.maximum(h + b1_ref[...], 0.0)

    h = jnp.dot(h.astype(jnp.bfloat16), w2_ref[...], preferred_element_type=jnp.float32)
    h = jnp.maximum(h + b2_ref[...], 0.0)

    h = jnp.dot(h.astype(jnp.bfloat16), w3_ref[...], preferred_element_type=jnp.float32)
    h = jnp.maximum(h + b3_ref[...], 0.0)

    y = jnp.dot(h.astype(jnp.bfloat16), w4_ref[...], preferred_element_type=jnp.float32)
    out_ref[...] = y + b4_ref[...]


def prepare_params(params):
    """Pad weights/biases to lane-aligned shapes; weights in bf16, biases in f32.

    Zero-padding of the extra weight rows/columns AND bias lanes guarantees the
    padded hidden units stay exactly 0 through ReLU, so they never contaminate
    the next layer.
    """
    padded = []
    for W, b in params:
        fi, fo = W.shape
        fi_p, fo_p = _round_up(fi, LANE), _round_up(fo, LANE)
        Wp = jnp.zeros((fi_p, fo_p), jnp.float32).at[:fi, :fo].set(W).astype(jnp.bfloat16)
        bp = jnp.zeros((1, fo_p), jnp.float32).at[:, :fo].set(b.reshape(1, -1))
        padded.append((Wp, bp))
    return padded


def qnetwork_forward(x, padded_params, action_size, *, tm=512):
    """Pallas forward pass.

    x: [batch, state_size] float32
    padded_params: output of prepare_params (4 layers).
    """
    batch, state_size = x.shape
    in_pad = padded_params[0][0].shape[0]      # padded fan-in of fc1
    out_pad = padded_params[-1][1].shape[1]    # padded fan-out of fc4

    # Batch tile: big enough to pipeline well, capped (and 8-aligned) for small batches.
    tm_eff = _round_up(min(tm, _round_up(batch, 8)), 8)
    batch_pad = _round_up(batch, tm_eff)

    # Zero-pad x to [batch_pad, in_pad] and cast to bf16 (halves the x DMA bytes;
    # the MXU operand would be bf16 either way).
    xp = (jnp.zeros((batch_pad, in_pad), jnp.float32)
          .at[:batch, :state_size].set(x)
          .astype(jnp.bfloat16))

    flat_args = []
    in_specs = [pl.BlockSpec((tm_eff, in_pad), lambda i: (i, 0))]
    for W, b in padded_params:
        flat_args.extend((W, b))
        # Constant index_maps: weights/biases stay VMEM-resident across batch tiles.
        in_specs.append(pl.BlockSpec(W.shape, lambda i: (0, 0)))
        in_specs.append(pl.BlockSpec(b.shape, lambda i: (0, 0)))

    out_spec = pl.BlockSpec((tm_eff, out_pad), lambda i: (i, 0))
    grid = (batch_pad // tm_eff,)

    out_padded = pl.pallas_call(
        qnetwork_kernel,
        out_shape=jax.ShapeDtypeStruct((batch_pad, out_pad), jnp.float32),
        grid=grid,
        in_specs=in_specs,
        out_specs=out_spec,
        compiler_params=pltpu.CompilerParams(
            # Batch tiles are independent -> shard across both TCs on v7x.
            dimension_semantics=("parallel",),
        ),
    )(xp, *flat_args)

    return out_padded[:batch, :action_size]


def init_linear(key, fan_in, fan_out):
    """Deterministic init mimicking PyTorch nn.Linear defaults:
    U(-1/sqrt(fan_in), 1/sqrt(fan_in)) for both weight and bias."""
    kw, kb = jax.random.split(key)
    bound = 1.0 / math.sqrt(fan_in)
    W = jax.random.uniform(kw, (fan_in, fan_out), jnp.float32, -bound, bound)
    b = jax.random.uniform(kb, (1, fan_out), jnp.float32, -bound, bound)
    return W, b


def reference_forward(x, params):
    """Plain-JAX reference mirroring the kernel's numerics (bf16 matmul inputs,
    f32 accumulation, f32 bias + ReLU)."""
    h = x
    n = len(params)
    for i, (W, b) in enumerate(params):
        h = jnp.dot(h.astype(jnp.bfloat16), W.astype(jnp.bfloat16),
                    preferred_element_type=jnp.float32) + b
        if i < n - 1:
            h = jnp.maximum(h, 0.0)
    return h


if __name__ == "__main__":
    # Module-consistent configuration (QNetwork defaults: start_filter=64, layers=1).
    state_size = 8
    action_size = 4
    start_filter = 64
    batch = 256          # large enough to exercise the batch grid (tm=128 -> 2 steps)

    key = jax.random.PRNGKey(0)
    keys = jax.random.split(key, 5)

    # Layer dims implied by QNetwork.__init__ with layers=1, start_filter=64:
    dims = [state_size,
            start_filter,        # fc1: 8   -> 64
            start_filter * 2,    # fc2: 64  -> 128
            start_filter,        # fc3: 128 -> 64
            action_size]         # fc4: 64  -> 4

    params = [init_linear(keys[li], dims[li], dims[li + 1]) for li in range(4)]
    padded_params = prepare_params(params)

    x = jax.random.normal(keys[4], (batch, state_size), jnp.float32)

    out = qnetwork_forward(x, padded_params, action_size, tm=128)
    out = jax.block_until_ready(out)

    ref = reference_forward(x, params)
    assert out.shape == (batch, action_size)
    assert jnp.allclose(out, ref, atol=1e-3, rtol=1e-3), "Pallas output mismatch vs reference"

    print("KERNEL_OK")
</pallas_src>

<mosaic_0001>
module attributes {stable_mosaic.version = 11 : i64} {
  func.func @qnetwork_kernel(%arg0: i32, %arg1: memref<128x128xbf16, #tpu.memory_space<vmem>>, %arg2: memref<128x128xbf16, #tpu.memory_space<vmem>>, %arg3: memref<1x128xf32, #tpu.memory_space<vmem>>, %arg4: memref<128x128xbf16, #tpu.memory_space<vmem>>, %arg5: memref<1x128xf32, #tpu.memory_space<vmem>>, %arg6: memref<128x128xbf16, #tpu.memory_space<vmem>>, %arg7: memref<1x128xf32, #tpu.memory_space<vmem>>, %arg8: memref<128x128xbf16, #tpu.memory_space<vmem>>, %arg9: memref<1x128xf32, #tpu.memory_space<vmem>>, %arg10: memref<128x128xf32, #tpu.memory_space<vmem>>) attributes {dimension_semantics = [#tpu.dimension_semantics<parallel>], iteration_bounds = array<i64: 2>, scalar_prefetch = 0 : i64, scratch_operands = 0 : i64, tpu.core_type = #tpu.core_type<tc>, window_params = [{transform_indices = @transform_0, window_bounds = array<i64: 128, 128>}, {pipeline_mode = #tpu.pipeline_mode<synchronous>, transform_indices = @transform_1, window_bounds = array<i64: 128, 128>}, {pipeline_mode = #tpu.pipeline_mode<synchronous>, transform_indices = @transform_2, window_bounds = array<i64: 1, 128>}, {pipeline_mode = #tpu.pipeline_mode<synchronous>, transform_indices = @transform_3, window_bounds = array<i64: 128, 128>}, {pipeline_mode = #tpu.pipeline_mode<synchronous>, transform_indices = @transform_4, window_bounds = array<i64: 1, 128>}, {pipeline_mode = #tpu.pipeline_mode<synchronous>, transform_indices = @transform_5, window_bounds = array<i64: 128, 128>}, {pipeline_mode = #tpu.pipeline_mode<synchronous>, transform_indices = @transform_6, window_bounds = array<i64: 1, 128>}, {pipeline_mode = #tpu.pipeline_mode<synchronous>, transform_indices = @transform_7, window_bounds = array<i64: 128, 128>}, {pipeline_mode = #tpu.pipeline_mode<synchronous>, transform_indices = @transform_8, window_bounds = array<i64: 1, 128>}, {transform_indices = @transform_9, window_bounds = array<i64: 128, 128>}]} {
    %c0 = arith.constant 0 : index
    %c0_0 = arith.constant 0 : index
    %0 = vector.load %arg1[%c0, %c0_0] : memref<128x128xbf16, #tpu.memory_space<vmem>>, vector<128x128xbf16>
    %c0_1 = arith.constant 0 : index
    %c0_2 = arith.constant 0 : index
    %1 = vector.load %arg2[%c0_1, %c0_2] : memref<128x128xbf16, #tpu.memory_space<vmem>>, vector<128x128xbf16>
    %cst = arith.constant dense<0.000000e+00> : vector<128x128xf32>
    %2 = tpu.matmul %0, %1, %cst {dimension_numbers = #tpu.dot_dimension_numbers<[1], [0], [0], [1], [0, 0, 1, 1], [], []>} : vector<128x128xbf16>, vector<128x128xbf16>, vector<128x128xf32> -> vector<128x128xf32>
    %c0_3 = arith.constant 0 : index
    %c0_4 = arith.constant 0 : index
    %3 = vector.load %arg3[%c0_3, %c0_4] : memref<1x128xf32, #tpu.memory_space<vmem>>, vector<1x128xf32>
    %4 = vector.broadcast %3 : vector<1x128xf32> to vector<128x128xf32>
    %5 = arith.addf %2, %4 : vector<128x128xf32>
    %cst_5 = arith.constant 0.000000e+00 : f32
    %6 = vector.broadcast %cst_5 : f32 to vector<128x128xf32>
    %7 = arith.maximumf %5, %6 : vector<128x128xf32>
    %8 = arith.truncf %7 : vector<128x128xf32> to vector<128x128xbf16>
    %c0_6 = arith.constant 0 : index
    %c0_7 = arith.constant 0 : index
    %9 = vector.load %arg4[%c0_6, %c0_7] : memref<128x128xbf16, #tpu.memory_space<vmem>>, vector<128x128xbf16>
    %cst_8 = arith.constant dense<0.000000e+00> : vector<128x128xf32>
    %10 = tpu.matmul %8, %9, %cst_8 {dimension_numbers = #tpu.dot_dimension_numbers<[1], [0], [0], [1], [0, 0, 1, 1], [], []>} : vector<128x128xbf16>, vector<128x128xbf16>, vector<128x128xf32> -> vector<128x128xf32>
    %c0_9 = arith.constant 0 : index
    %c0_10 = arith.constant 0 : index
    %11 = vector.load %arg5[%c0_9, %c0_10] : memref<1x128xf32, #tpu.memory_space<vmem>>, vector<1x128xf32>
    %12 = vector.broadcast %11 : vector<1x128xf32> to vector<128x128xf32>
    %13 = arith.addf %10, %12 : vector<128x128xf32>
    %cst_11 = arith.constant 0.000000e+00 : f32
    %14 = vector.broadcast %cst_11 : f32 to vector<128x128xf32>
    %15 = arith.maximumf %13, %14 : vector<128x128xf32>
    %16 = arith.truncf %15 : vector<128x128xf32> to vector<128x128xbf16>
    %c0_12 = arith.constant 0 : index
    %c0_13 = arith.constant 0 : index
    %17 = vector.load %arg6[%c0_12, %c0_13] : memref<128x128xbf16, #tpu.memory_space<vmem>>, vector<128x128xbf16>
    %cst_14 = arith.constant dense<0.000000e+00> : vector<128x128xf32>
    %18 = tpu.matmul %16, %17, %cst_14 {dimension_numbers = #tpu.dot_dimension_numbers<[1], [0], [0], [1], [0, 0, 1, 1], [], []>} : vector<128x128xbf16>, vector<128x128xbf16>, vector<128x128xf32> -> vector<128x128xf32>
    %c0_15 = arith.constant 0 : index
    %c0_16 = arith.constant 0 : index
    %19 = vector.load %arg7[%c0_15, %c0_16] : memref<1x128xf32, #tpu.memory_space<vmem>>, vector<1x128xf32>
    %20 = vector.broadcast %19 : vector<1x128xf32> to vector<128x128xf32>
    %21 = arith.addf %18, %20 : vector<128x128xf32>
    %cst_17 = arith.constant 0.000000e+00 : f32
    %22 = vector.broadcast %cst_17 : f32 to vector<128x128xf32>
    %23 = arith.maximumf %21, %22 : vector<128x128xf32>
    %24 = arith.truncf %23 : vector<128x128xf32> to vector<128x128xbf16>
    %c0_18 = arith.constant 0 : index
    %c0_19 = arith.constant 0 : index
    %25 = vector.load %arg8[%c0_18, %c0_19] : memref<128x128xbf16, #tpu.memory_space<vmem>>, vector<128x128xbf16>
    %cst_20 = arith.constant dense<0.000000e+00> : vector<128x128xf32>
    %26 = tpu.matmul %24, %25, %cst_20 {dimension_numbers = #tpu.dot_dimension_numbers<[1], [0], [0], [1], [0, 0, 1, 1], [], []>} : vector<128x128xbf16>, vector<128x128xbf16>, vector<128x128xf32> -> vector<128x128xf32>
    %c0_21 = arith.constant 0 : index
    %c0_22 = arith.constant 0 : index
    %27 = vector.load %arg9[%c0_21, %c0_22] : memref<1x128xf32, #tpu.memory_space<vmem>>, vector<1x128xf32>
    %28 = vector.broadcast %27 : vector<1x128xf32> to vector<128x128xf32>
    %29 = arith.addf %26, %28 : vector<128x128xf32>
    %c0_23 = arith.constant 0 : index
    %c0_24 = arith.constant 0 : index
    %30 = vector.load %arg10[%c0_23, %c0_24] : memref<128x128xf32, #tpu.memory_space<vmem>>, vector<128x128xf32>
    tpu.vector_store %arg10[%c0_23, %c0_24], %29 {strides = array<i32>} : memref<128x128xf32, #tpu.memory_space<vmem>>, vector<128x128xf32>,
    return
  }
  func.func @transform_0(%arg0: i32) -> (i32, i32) {
    %c0_i32 = arith.constant 0 : i32
    %c0_i32_0 = arith.constant 0 : i32
    return %arg0, %c0_i32 : i32, i32
  }
  func.func @transform_1(%arg0: i32) -> (i32, i32) {
    %c0_i32 = arith.constant 0 : i32
    %c0_i32_0 = arith.constant 0 : i32
    %c0_i32_1 = arith.constant 0 : i32
    return %c0_i32, %c0_i32_0 : i32, i32
  }
  func.func @transform_2(%arg0: i32) -> (i32, i32) {
    %c0_i32 = arith.constant 0 : i32
    %c0_i32_0 = arith.constant 0 : i32
    %c0_i32_1 = arith.constant 0 : i32
    return %c0_i32, %c0_i32_0 : i32, i32
  }
  func.func @transform_3(%arg0: i32) -> (i32, i32) {
    %c0_i32 = arith.constant 0 : i32
    %c0_i32_0 = arith.constant 0 : i32
    %c0_i32_1 = arith.constant 0 : i32
    return %c0_i32, %c0_i32_0 : i32, i32
  }
  func.func @transform_4(%arg0: i32) -> (i32, i32) {
    %c0_i32 = arith.constant 0 : i32
    %c0_i32_0 = arith.constant 0 : i32
    %c0_i32_1 = arith.constant 0 : i32
    return %c0_i32, %c0_i32_0 : i32, i32
  }
  func.func @transform_5(%arg0: i32) -> (i32, i32) {
    %c0_i32 = arith.constant 0 : i32
    %c0_i32_0 = arith.constant 0 : i32
    %c0_i32_1 = arith.constant 0 : i32
    return %c0_i32, %c0_i32_0 : i32, i32
  }
  func.func @transform_6(%arg0: i32) -> (i32, i32) {
    %c0_i32 = arith.constant 0 : i32
    %c0_i32_0 = arith.constant 0 : i32
    %c0_i32_1 = arith.constant 0 : i32
    return %c0_i32, %c0_i32_0 : i32, i32
  }
  func.func @transform_7(%arg0: i32) -> (i32, i32) {
    %c0_i32 = arith.constant 0 : i32
    %c0_i32_0 = arith.constant 0 : i32
    %c0_i32_1 = arith.constant 0 : i32
    return %c0_i32, %c0_i32_0 : i32, i32
  }
  func.func @transform_8(%arg0: i32) -> (i32, i32) {
    %c0_i32 = arith.constant 0 : i32
    %c0_i32_0 = arith.constant 0 : i32
    %c0_i32_1 = arith.constant 0 : i32
    return %c0_i32, %c0_i32_0 : i32, i32
  }
  func.func @transform_9(%arg0: i32) -> (i32, i32) {
    %c0_i32 = arith.constant 0 : i32
    %c0_i32_0 = arith.constant 0 : i32
    return %arg0, %c0_i32 : i32, i32
  }
}

</mosaic_0001>

<llo_original>
// kernel: tpu_custom_call.1
$region0: #{tpu_custom_call.1}
  #allocation0 [shape = 'u32[]', space=smem, size = 0x4, offset = 0x4, fixed_abs, tag = 'smem constant byte address 0x4 - core index']
  #allocation1 [shape = 'u32[144,128]{1,0:T(1,128)}', space=vmem, size = 0x12000, scoped, tag = 'internal scratch']
  %s0 = inlined_call_operand.hbm [shape: bf16[256,128], index: 0, kind: input, shape index: {}]
  %s1 = inlined_call_operand.hbm [shape: bf16[128,128], index: 1, kind: input, shape index: {}]
  %s2 = inlined_call_operand.vmem [shape: f32[1,128], index: 2, kind: input, shape index: {}]
  %s3 = inlined_call_operand.hbm [shape: bf16[128,128], index: 3, kind: input, shape index: {}]
  %s4 = inlined_call_operand.vmem [shape: f32[1,128], index: 4, kind: input, shape index: {}]
  %s5 = inlined_call_operand.hbm [shape: bf16[128,128], index: 5, kind: input, shape index: {}]
  %s6 = inlined_call_operand.vmem [shape: f32[1,128], index: 6, kind: input, shape index: {}]
  %s7 = inlined_call_operand.hbm [shape: bf16[128,128], index: 7, kind: input, shape index: {}]
  %s8 = inlined_call_operand.vmem [shape: f32[1,128], index: 8, kind: input, shape index: {}]
  %s9 = inlined_call_operand.hbm [shape: f32[256,128], index: 9, kind: output, shape index: {}]
  %s10 = sld [smem:[#allocation0]]
  $region89: #{tpu_custom_call.1} parent=0
    _
  %s12 = ssub.s32 1, %s10
  %s13 = scalar_select 0, %s12, %s10
  $region1: #{tpu_custom_call.1} parent=0
    #allocation2 [shape = 'u8[65536]{0}', space=vmem, size = 0x10000, scoped, tag = 'input window, operand 0']
    #allocation3 [shape = 's32[2]{0}', space=sflag, size = 0x8, scoped, tag = 'scoped memory for tpu_custom_call.1']
    #allocation4 [shape = 's32[2]{0}', space=sflag, size = 0x8, scoped, tag = 'scoped memory for tpu_custom_call.1']
    #allocation5 [shape = 'u8[32768]{0}', space=vmem, size = 0x8000, scoped, tag = 'input window, operand 1, single buffered']
    #allocation6 [shape = 's32[1]{0}', space=sflag, size = 0x4, scoped, tag = 'scoped memory for tpu_custom_call.1']
    #allocation7 [shape = 'u8[32768]{0}', space=vmem, size = 0x8000, scoped, tag = 'input window, operand 3, single buffered']
    #allocation8 [shape = 'u8[32768]{0}', space=vmem, size = 0x8000, scoped, tag = 'input window, operand 5, single buffered']
    #allocation9 [shape = 's32[1]{0}', space=sflag, size = 0x4, scoped, tag = 'scoped memory for tpu_custom_call.1']
    #allocation10 [shape = 'u8[32768]{0}', space=vmem, size = 0x8000, scoped, tag = 'input window, operand 7, single buffered']
    #allocation11 [shape = 'u8[131072]{0}', space=vmem, size = 0x20000, scoped, tag = 'output window, operand 0']
    %14 = vsyncpa [#allocation3], 0
    %s15 = scalar_lea.sflag [#allocation3], 1
    %16 = vsyncpa %s15, 0
    %17 = vsyncpa [#allocation6], 0
    %18 = vsyncpa [#allocation9], 0
    %19 = vsyncpa [#allocation4], 0
    %s20 = scalar_lea.sflag [#allocation4], 1
    %21 = vsyncpa %s20, 0
    loop: start=0, step=1, limit=4
    $region2: #{tpu_custom_call.1} parent=1 // loop_pre_header
      _
    $region3: #{tpu_custom_call.1} parent=1 // loop_header
      %s23 = sphi 0, %s27
      %p24 = scmp.ge.s32.totalorder %s23, 4
      %s33 = sphi 0, %s35
      %s36 = sphi 0, %s33
      %s37 = sphi 0, %s36
      %s53 = sphi 0, %s37
      %s57 = sphi 0, %s57
      %s59 = sphi 0, %s57
      %s60 = sphi 0, %s59
      %s74 = sphi 0, %s60
      %s78 = sphi 0, %s78
      %s80 = sphi 0, %s78
      %s81 = sphi 0, %s80
      %s95 = sphi 0, %s81
      %s99 = sphi 0, %s99
      %s101 = sphi 0, %s99
      %s102 = sphi 0, %s101
      %s116 = sphi 0, %s102
      %s120 = sphi 0, %s120
      %s122 = sphi 0, %s120
      %s123 = sphi 0, %s122
      %s137 = sphi 0, %s123
      %s141 = sphi 0, %s141
      %s143 = sphi 0, %s141
      %s144 = sphi 0, %s143
      %s158 = sphi 0, %s144
      %s162 = sphi 0, %s162
      %s164 = sphi 0, %s162
      %s165 = sphi 0, %s164
      %s179 = sphi 0, %s165
      %s183 = sphi 0, %s183
      %s185 = sphi 0, %s183
      %s186 = sphi 0, %s185
      %s200 = sphi 0, %s186
      %s204 = sphi 0, %s204
      %s206 = sphi 0, %s204
      %s207 = sphi 0, %s206
      %s221 = sphi 0, %s207
      %s227 = sphi 0, %s229
      %s230 = sphi 0, %s227
      %s231 = sphi 0, %s230
      %s247 = sphi 0, %s231
    $region4: #{tpu_custom_call.1} parent=1 // loop_header_branch
      %26 = sbr.rel (%p24) target = $region8
    $region5: #{tpu_custom_call.1} parent=1 // loop_body
      %s28 = ssub.s32 %s23, 1
      %s29 = ssub.s32 %s23, 2
      %s30 = sadd.s32 %s23, 1
      %s31 = ssub.s32 %s23, %s30
      %p32 = scmp.eq.s32.totalorder %s31, 0
      %s34 = sadd.s32 %s33, 1
      %s35 = scalar_select %p32, %s33, %s34
      %p38 = pneg %p32
      %p39 = scmp.eq.s32.totalorder %s23, 1
      %p40 = por %p38, %p39
      %p41 = scmp.ne.s32.totalorder %s33, %s36
      %p42 = scmp.eq.s32.totalorder %s23, 0
      %p43 = por %p41, %p42
      %p44 = scmp.ne.s32.totalorder %s33, %s36
      %p45 = scmp.eq.s32.totalorder %s28, 1
      %p46 = por %p44, %p45
      %p47 = scmp.ne.s32.totalorder %s36, %s37
      %p48 = scmp.eq.s32.totalorder %s28, 0
      %p49 = por %p47, %p48
      %p50 = scmp.ne.s32.totalorder %s36, %s37
      %p51 = scmp.eq.s32.totalorder %s29, 1
      %p52 = por %p50, %p51
      %p54 = scmp.ne.s32.totalorder %s37, %s53
      %p55 = scmp.eq.s32.totalorder %s29, 0
      %p56 = por %p54, %p55
      %s58 = sadd.s32 %s57, 1
      %p61 = scmp.eq.s32.totalorder %s23, 1
      %p62 = scmp.ne.s32.totalorder %s57, %s59
      %p63 = scmp.eq.s32.totalorder %s23, 0
      %p64 = por %p62, %p63
      %p65 = scmp.ne.s32.totalorder %s57, %s59
      %p66 = scmp.eq.s32.totalorder %s28, 1
      %p67 = por %p65, %p66
      %p68 = scmp.ne.s32.totalorder %s59, %s60
      %p69 = scmp.eq.s32.totalorder %s28, 0
      %p70 = por %p68, %p69
      %p71 = scmp.ne.s32.totalorder %s59, %s60
      %p72 = scmp.eq.s32.totalorder %s29, 1
      %p73 = por %p71, %p72
      %p75 = scmp.ne.s32.totalorder %s60, %s74
      %p76 = scmp.eq.s32.totalorder %s29, 0
      %p77 = por %p75, %p76
      %s79 = sadd.s32 %s78, 1
      %p82 = scmp.eq.s32.totalorder %s23, 1
      %p83 = scmp.ne.s32.totalorder %s78, %s80
      %p84 = scmp.eq.s32.totalorder %s23, 0
      %p85 = por %p83, %p84
      %p86 = scmp.ne.s32.totalorder %s78, %s80
      %p87 = scmp.eq.s32.totalorder %s28, 1
      %p88 = por %p86, %p87
      %p89 = scmp.ne.s32.totalorder %s80, %s81
      %p90 = scmp.eq.s32.totalorder %s28, 0
      %p91 = por %p89, %p90
      %p92 = scmp.ne.s32.totalorder %s80, %s81
      %p93 = scmp.eq.s32.totalorder %s29, 1
      %p94 = por %p92, %p93
      %p96 = scmp.ne.s32.totalorder %s81, %s95
      %p97 = scmp.eq.s32.totalorder %s29, 0
      %p98 = por %p96, %p97
      %s100 = sadd.s32 %s99, 1
      %p103 = scmp.eq.s32.totalorder %s23, 1
      %p104 = scmp.ne.s32.totalorder %s99, %s101
      %p105 = scmp.eq.s32.totalorder %s23, 0
      %p106 = por %p104, %p105
      %p107 = scmp.ne.s32.totalorder %s99, %s101
      %p108 = scmp.eq.s32.totalorder %s28, 1
      %p109 = por %p107, %p108
      %p110 = scmp.ne.s32.totalorder %s101, %s102
      %p111 = scmp.eq.s32.totalorder %s28, 0
      %p112 = por %p110, %p111
      %p113 = scmp.ne.s32.totalorder %s101, %s102
      %p114 = scmp.eq.s32.totalorder %s29, 1
      %p115 = por %p113, %p114
      %p117 = scmp.ne.s32.totalorder %s102, %s116
      %p118 = scmp.eq.s32.totalorder %s29, 0
      %p119 = por %p117, %p118
      %s121 = sadd.s32 %s120, 1
      %p124 = scmp.eq.s32.totalorder %s23, 1
      %p125 = scmp.ne.s32.totalorder %s120, %s122
      %p126 = scmp.eq.s32.totalorder %s23, 0
      %p127 = por %p125, %p126
      %p128 = scmp.ne.s32.totalorder %s120, %s122
      %p129 = scmp.eq.s32.totalorder %s28, 1
      %p130 = por %p128, %p129
      %p131 = scmp.ne.s32.totalorder %s122, %s123
      %p132 = scmp.eq.s32.totalorder %s28, 0
      %p133 = por %p131, %p132
      %p134 = scmp.ne.s32.totalorder %s122, %s123
      %p135 = scmp.eq.s32.totalorder %s29, 1
      %p136 = por %p134, %p135
      %p138 = scmp.ne.s32.totalorder %s123, %s137
      %p139 = scmp.eq.s32.totalorder %s29, 0
      %p140 = por %p138, %p139
      %s142 = sadd.s32 %s141, 1
      %p145 = scmp.eq.s32.totalorder %s23, 1
      %p146 = scmp.ne.s32.totalorder %s141, %s143
      %p147 = scmp.eq.s32.totalorder %s23, 0
      %p148 = por %p146, %p147
      %p149 = scmp.ne.s32.totalorder %s141, %s143
      %p150 = scmp.eq.s32.totalorder %s28, 1
      %p151 = por %p149, %p150
      %p152 = scmp.ne.s32.totalorder %s143, %s144
      %p153 = scmp.eq.s32.totalorder %s28, 0
      %p154 = por %p152, %p153
      %p155 = scmp.ne.s32.totalorder %s143, %s144
      %p156 = scmp.eq.s32.totalorder %s29, 1
      %p157 = por %p155, %p156
      %p159 = scmp.ne.s32.totalorder %s144, %s158
      %p160 = scmp.eq.s32.totalorder %s29, 0
      %p161 = por %p159, %p160
      %s163 = sadd.s32 %s162, 1
      %p166 = scmp.eq.s32.totalorder %s23, 1
      %p167 = scmp.ne.s32.totalorder %s162, %s164
      %p168 = scmp.eq.s32.totalorder %s23, 0
      %p169 = por %p167, %p168
      %p170 = scmp.ne.s32.totalorder %s162, %s164
      %p171 = scmp.eq.s32.totalorder %s28, 1
      %p172 = por %p170, %p171
      %p173 = scmp.ne.s32.totalorder %s164, %s165
      %p174 = scmp.eq.s32.totalorder %s28, 0
      %p175 = por %p173, %p174
      %p176 = scmp.ne.s32.totalorder %s164, %s165
      %p177 = scmp.eq.s32.totalorder %s29, 1
      %p178 = por %p176, %p177
      %p180 = scmp.ne.s32.totalorder %s165, %s179
      %p181 = scmp.eq.s32.totalorder %s29, 0
      %p182 = por %p180, %p181
      %s184 = sadd.s32 %s183, 1
      %p187 = scmp.eq.s32.totalorder %s23, 1
      %p188 = scmp.ne.s32.totalorder %s183, %s185
      %p189 = scmp.eq.s32.totalorder %s23, 0
      %p190 = por %p188, %p189
      %p191 = scmp.ne.s32.totalorder %s183, %s185
      %p192 = scmp.eq.s32.totalorder %s28, 1
      %p193 = por %p191, %p192
      %p194 = scmp.ne.s32.totalorder %s185, %s186
      %p195 = scmp.eq.s32.totalorder %s28, 0
      %p196 = por %p194, %p195
      %p197 = scmp.ne.s32.totalorder %s185, %s186
      %p198 = scmp.eq.s32.totalorder %s29, 1
      %p199 = por %p197, %p198
      %p201 = scmp.ne.s32.totalorder %s186, %s200
      %p202 = scmp.eq.s32.totalorder %s29, 0
      %p203 = por %p201, %p202
      %s205 = sadd.s32 %s204, 1
      %p208 = scmp.eq.s32.totalorder %s23, 1
      %p209 = scmp.ne.s32.totalorder %s204, %s206
      %p210 = scmp.eq.s32.totalorder %s23, 0
      %p211 = por %p209, %p210
      %p212 = scmp.ne.s32.totalorder %s204, %s206
      %p213 = scmp.eq.s32.totalorder %s28, 1
      %p214 = por %p212, %p213
      %p215 = scmp.ne.s32.totalorder %s206, %s207
      %p216 = scmp.eq.s32.totalorder %s28, 0
      %p217 = por %p215, %p216
      %p218 = scmp.ne.s32.totalorder %s206, %s207
      %p219 = scmp.eq.s32.totalorder %s29, 1
      %p220 = por %p218, %p219
      %p222 = scmp.ne.s32.totalorder %s207, %s221
      %p223 = scmp.eq.s32.totalorder %s29, 0
      %p224 = por %p222, %p223
      %s225 = ssub.s32 %s23, %s30
      %p226 = scmp.eq.s32.totalorder %s225, 0
      %s228 = sadd.s32 %s227, 1
      %s229 = scalar_select %p226, %s227, %s228
      %p232 = pneg %p226
      %p233 = scmp.eq.s32.totalorder %s23, 1
      %p234 = por %p232, %p233
      %p235 = scmp.ne.s32.totalorder %s227, %s230
      %p236 = scmp.eq.s32.totalorder %s23, 0
      %p237 = por %p235, %p236
      %p238 = scmp.ne.s32.totalorder %s227, %s230
      %p239 = scmp.eq.s32.totalorder %s28, 1
      %p240 = por %p238, %p239
      %p241 = scmp.ne.s32.totalorder %s230, %s231
      %p242 = scmp.eq.s32.totalorder %s28, 0
      %p243 = por %p241, %p242
      %p244 = scmp.ne.s32.totalorder %s230, %s231
      %p245 = scmp.eq.s32.totalorder %s29, 1
      %p246 = por %p244, %p245
      %p248 = scmp.ne.s32.totalorder %s231, %s247
      %p249 = scmp.eq.s32.totalorder %s29, 0
      %p250 = por %p248, %p249
      %p251 = scmp.le.s32.totalorder 1, %s23
      %p252 = scmp.lt.s32.totalorder %s23, 3
      %p253 = pnand %p251, %p252
      %p254 = pneg %p253
      // Predicated region
      $region9: #{tpu_custom_call.1} parent=5 // pred_check
        _
      $region10: #{tpu_custom_call.1} parent=5 // pred_check_branch
        %256 = sbr.rel (%p253) target = $region12
      $region11: #{tpu_custom_call.1} parent=5 // pred_region
        %s257 = ssub.s32 %s23, 1
        // Predicated region
        $region13: #{tpu_custom_call.1} parent=11 // pred_check
          %p258 = pneg %p70
        $region14: #{tpu_custom_call.1} parent=11 // pred_check_branch
          %260 = sbr.rel (%p258) target = $region16
        $region15: #{tpu_custom_call.1} parent=11 // pred_region
          %s262 = ssub.s32 1024, 1024
          %263 = vsyncadd [#allocation6], %s262
          %s264 = sshll.u32 [#allocation5], 4
          %s265 = int_to_ptr.vmem [resolvable:$true] %s264
          %270 = dma.hbm_to_vmem [thread:$0]  %s1, 1024, %s265, [#allocation6], 64, 64, 4
        $region16: #{tpu_custom_call.1} parent=11 // pred_fallthru
          _
        // Predicated region
        $region17: #{tpu_custom_call.1} parent=11 // pred_check
          %p271 = pneg %p91
        $region18: #{tpu_custom_call.1} parent=11 // pred_check_branch
          %273 = sbr.rel (%p271) target = $region20
        $region19: #{tpu_custom_call.1} parent=11 // pred_region
          _
        $region20: #{tpu_custom_call.1} parent=11 // pred_fallthru
          _
        // Predicated region
        $region21: #{tpu_custom_call.1} parent=11 // pred_check
          %p274 = pneg %p112
        $region22: #{tpu_custom_call.1} parent=11 // pred_check_branch
          %276 = sbr.rel (%p274) target = $region24
        $region23: #{tpu_custom_call.1} parent=11 // pred_region
          %s278 = ssub.s32 1024, 1024
          %279 = vsyncadd [#allocation6], %s278
          %s280 = sshll.u32 [#allocation7], 4
          %s281 = int_to_ptr.vmem [resolvable:$true] %s280
          %286 = dma.hbm_to_vmem [thread:$0]  %s3, 1024, %s281, [#allocation6], 64, 64, 4
        $region24: #{tpu_custom_call.1} parent=11 // pred_fallthru
          _
        // Predicated region
        $region25: #{tpu_custom_call.1} parent=11 // pred_check
          %p287 = pneg %p133
        $region26: #{tpu_custom_call.1} parent=11 // pred_check_branch
          %289 = sbr.rel (%p287) target = $region28
        $region27: #{tpu_custom_call.1} parent=11 // pred_region
          _
        $region28: #{tpu_custom_call.1} parent=11 // pred_fallthru
          _
        // Predicated region
        $region29: #{tpu_custom_call.1} parent=11 // pred_check
          %p290 = pneg %p154
        $region30: #{tpu_custom_call.1} parent=11 // pred_check_branch
          %292 = sbr.rel (%p290) target = $region32
        $region31: #{tpu_custom_call.1} parent=11 // pred_region
          %s294 = ssub.s32 1024, 1024
          %295 = vsyncadd [#allocation9], %s294
          %s296 = sshll.u32 [#allocation8], 4
          %s297 = int_to_ptr.vmem [resolvable:$true] %s296
          %302 = dma.hbm_to_vmem [thread:$0]  %s5, 1024, %s297, [#allocation9], 64, 64, 4
        $region32: #{tpu_custom_call.1} parent=11 // pred_fallthru
          _
        // Predicated region
        $region33: #{tpu_custom_call.1} parent=11 // pred_check
          %p303 = pneg %p175
        $region34: #{tpu_custom_call.1} parent=11 // pred_check_branch
          %305 = sbr.rel (%p303) target = $region36
        $region35: #{tpu_custom_call.1} parent=11 // pred_region
          _
        $region36: #{tpu_custom_call.1} parent=11 // pred_fallthru
          _
        // Predicated region
        $region37: #{tpu_custom_call.1} parent=11 // pred_check
          %p306 = pneg %p196
        $region38: #{tpu_custom_call.1} parent=11 // pred_check_branch
          %308 = sbr.rel (%p306) target = $region40
        $region39: #{tpu_custom_call.1} parent=11 // pred_region
          %s310 = ssub.s32 1024, 1024
          %311 = vsyncadd [#allocation9], %s310
          %s312 = sshll.u32 [#allocation10], 4
          %s313 = int_to_ptr.vmem [resolvable:$true] %s312
          %318 = dma.hbm_to_vmem [thread:$0]  %s7, 1024, %s313, [#allocation9], 64, 64, 4
        $region40: #{tpu_custom_call.1} parent=11 // pred_fallthru
          _
        // Predicated region
        $region41: #{tpu_custom_call.1} parent=11 // pred_check
          %p319 = pneg %p217
        $region42: #{tpu_custom_call.1} parent=11 // pred_check_branch
          %321 = sbr.rel (%p319) target = $region44
        $region43: #{tpu_custom_call.1} parent=11 // pred_region
          _
        $region44: #{tpu_custom_call.1} parent=11 // pred_fallthru
          _
      $region12: #{tpu_custom_call.1} parent=5 // pred_fallthru
        _
      %p322 = scmp.lt.s32.totalorder %s23, 2
      // Predicated region
      $region45: #{tpu_custom_call.1} parent=5 // pred_check
        %p323 = pneg %p322
      $region46: #{tpu_custom_call.1} parent=5 // pred_check_branch
        %325 = sbr.rel (%p323) target = $region48
      $region47: #{tpu_custom_call.1} parent=5 // pred_region
        // Predicated region
        $region49: #{tpu_custom_call.1} parent=47 // pred_check
          %p326 = pneg %p43
        $region50: #{tpu_custom_call.1} parent=47 // pred_check_branch
          %328 = sbr.rel (%p326) target = $region52
        $region51: #{tpu_custom_call.1} parent=47 // pred_region
          %s329 = sand.u32 %s33, 1
          %s330 = scalar_lea.sflag [#allocation3], %s329
          %s331 = sand.u32 %s33, 1
          %s332 = smul.addr %s331, 64
          %s333 = scalar_lea.vmem [#allocation2], %s332
          %s334 = smul.u32 16, %s23
          %s336 = ssub.s32 1024, 1024
          %337 = vsyncadd %s330, %s336
          %s338 = smul.addr %s334, 64
          %s339 = scalar_lea.hbm %s0, %s338
          %s340 = sshll.u32 %s333, 4
          %s341 = int_to_ptr.vmem [resolvable:$true] %s340
          %346 = dma.hbm_to_vmem [thread:$0]  %s339, 1024, %s341, %s330, 64, 64, 4
        $region52: #{tpu_custom_call.1} parent=47 // pred_fallthru
          _
      $region48: #{tpu_custom_call.1} parent=5 // pred_fallthru
        _
      %p347 = scmp.le.s32.totalorder 1, %s23
      %p348 = scmp.lt.s32.totalorder %s23, 3
      %p349 = pnand %p347, %p348
      %p350 = pneg %p349
      // Predicated region
      $region53: #{tpu_custom_call.1} parent=5 // pred_check
        _
      $region54: #{tpu_custom_call.1} parent=5 // pred_check_branch
        %352 = sbr.rel (%p349) target = $region56
      $region55: #{tpu_custom_call.1} parent=5 // pred_region
        %s353 = ssub.s32 %s23, 1
        %s354 = sand.u32 %s36, 1
        %s355 = scalar_lea.sflag [#allocation3], %s354
        %s356 = sand.u32 %s36, 1
        %s357 = smul.addr %s356, 64
        %s358 = scalar_lea.vmem [#allocation2], %s357
        // Predicated region
        $region57: #{tpu_custom_call.1} parent=55 // pred_check
          %p359 = pneg %p49
        $region58: #{tpu_custom_call.1} parent=55 // pred_check_branch
          %361 = sbr.rel (%p359) target = $region60
        $region59: #{tpu_custom_call.1} parent=55 // pred_region
          %362 = dma.done %s355, 1024
        $region60: #{tpu_custom_call.1} parent=55 // pred_fallthru
          _
        // Predicated region
        $region61: #{tpu_custom_call.1} parent=55 // pred_check
          %p363 = pneg %p70
        $region62: #{tpu_custom_call.1} parent=55 // pred_check_branch
          %365 = sbr.rel (%p363) target = $region64
        $region63: #{tpu_custom_call.1} parent=55 // pred_region
          %366 = dma.done [#allocation6], 1024
        $region64: #{tpu_custom_call.1} parent=55 // pred_fallthru
          _
        // Predicated region
        $region65: #{tpu_custom_call.1} parent=55 // pred_check
          %p367 = pneg %p112
        $region66: #{tpu_custom_call.1} parent=55 // pred_check_branch
          %369 = sbr.rel (%p367) target = $region68
        $region67: #{tpu_custom_call.1} parent=55 // pred_region
          %370 = dma.done [#allocation6], 1024
        $region68: #{tpu_custom_call.1} parent=55 // pred_fallthru
          _
        // Predicated region
        $region69: #{tpu_custom_call.1} parent=55 // pred_check
          %p371 = pneg %p154
        $region70: #{tpu_custom_call.1} parent=55 // pred_check_branch
          %373 = sbr.rel (%p371) target = $region72
        $region71: #{tpu_custom_call.1} parent=55 // pred_region
          %374 = dma.done [#allocation9], 1024
        $region72: #{tpu_custom_call.1} parent=55 // pred_fallthru
          _
        // Predicated region
        $region73: #{tpu_custom_call.1} parent=55 // pred_check
          %p375 = pneg %p196
        $region74: #{tpu_custom_call.1} parent=55 // pred_check_branch
          %377 = sbr.rel (%p375) target = $region76
        $region75: #{tpu_custom_call.1} parent=55 // pred_region
          %378 = dma.done [#allocation9], 1024
        $region76: #{tpu_custom_call.1} parent=55 // pred_fallthru
          _
        %s379 = sand.u32 %s36, 1
        %s380 = scalar_lea.sflag [#allocation3], %s379
        %s381 = sand.u32 %s36, 1
        %s382 = smul.addr %s381, 64
        %s383 = scalar_lea.vmem [#allocation2], %s382
        %p384 = pneg %p49
        %p385 = pneg %p46
        %p386 = pneg %p70
        %p387 = pneg %p67
        %p388 = pneg %p91
        %p389 = pneg %p88
        %p390 = pneg %p112
        %p391 = pneg %p109
        %p392 = pneg %p133
        %p393 = pneg %p130
        %p394 = pneg %p154
        %p395 = pneg %p151
        %p396 = pneg %p175
        %p397 = pneg %p172
        %p398 = pneg %p196
        %p399 = pneg %p193
        %p400 = pneg %p217
        %p401 = pneg %p214
        %p402 = pneg %p243
        %p403 = pneg %p240
        %s404 = sand.u32 %s230, 1
        %s405 = scalar_lea.sflag [#allocation4], %s404
        %s406 = sand.u32 %s230, 1
        %s407 = smul.addr %s406, 128
        %s408 = scalar_lea.vmem [#allocation11], %s407
        %s409 = smul.u32 16, %s28
        %s410 = smul.u32 16, %s28
        %v412 = vld [vmem:[%s358] sm:$0xf]
        %v413 = vld [vmem:[%s358 + $0x4] sm:$0xf]
        %v414 = vld [vmem:[%s358 + $0x8] sm:$0xf]
        %v415 = vld [vmem:[%s358 + $0xc] sm:$0xf]
        %v416 = vld [vmem:[%s358 + $0x10] sm:$0xf]
        %v417 = vld [vmem:[%s358 + $0x14] sm:$0xf]
        %v418 = vld [vmem:[%s358 + $0x18] sm:$0xf]
        %v419 = vld [vmem:[%s358 + $0x1c] sm:$0xf]
        %v420 = vld [vmem:[%s358 + $0x20] sm:$0xf]
        %v421 = vld [vmem:[%s358 + $0x24] sm:$0xf]
        %v422 = vld [vmem:[%s358 + $0x28] sm:$0xf]
        %v423 = vld [vmem:[%s358 + $0x2c] sm:$0xf]
        %v424 = vld [vmem:[%s358 + $0x30] sm:$0xf]
        %v425 = vld [vmem:[%s358 + $0x34] sm:$0xf]
        %v426 = vld [vmem:[%s358 + $0x38] sm:$0xf]
        %v427 = vld [vmem:[%s358 + $0x3c] sm:$0xf]
        %v428 = vld [vmem:[#allocation5] sm:$0xf]
        %v429 = vld [vmem:[#allocation5 + $0x4] sm:$0xf]
        %v430 = vld [vmem:[#allocation5 + $0x8] sm:$0xf]
        %v431 = vld [vmem:[#allocation5 + $0xc] sm:$0xf]
        %v432 = vld [vmem:[#allocation5 + $0x10] sm:$0xf]
        %v433 = vld [vmem:[#allocation5 + $0x14] sm:$0xf]
        %v434 = vld [vmem:[#allocation5 + $0x18] sm:$0xf]
        %v435 = vld [vmem:[#allocation5 + $0x1c] sm:$0xf]
        %v436 = vld [vmem:[#allocation5 + $0x20] sm:$0xf]
        %v437 = vld [vmem:[#allocation5 + $0x24] sm:$0xf]
        %v438 = vld [vmem:[#allocation5 + $0x28] sm:$0xf]
        %v439 = vld [vmem:[#allocation5 + $0x2c] sm:$0xf]
        %v440 = vld [vmem:[#allocation5 + $0x30] sm:$0xf]
        %v441 = vld [vmem:[#allocation5 + $0x34] sm:$0xf]
        %v442 = vld [vmem:[#allocation5 + $0x38] sm:$0xf]
        %v443 = vld [vmem:[#allocation5 + $0x3c] sm:$0xf]
        %v444 = vld [vmem:[%s2] sm:$0x1]
        %v446 = vlaneseq
        %v447 = vshrl.u32 %v446, 7
        %v448 = vsub.s32 0, %v447
        %v449 = vrot.slane %v444, %v448
        %v467 = vunpack.c.l.b16 %v412
        %v468 = vunpack.c.l.b16 %v413
        %v469 = vunpack.c.l.b16 %v414
        %v470 = vunpack.c.l.b16 %v415
        %v471 = vunpack.c.l.b16 %v416
        %v472 = vunpack.c.l.b16 %v417
        %v473 = vunpack.c.l.b16 %v418
        %v474 = vunpack.c.l.b16 %v419
        %v475 = vunpack.c.l.b16 %v420
        %v476 = vunpack.c.l.b16 %v421
        %v477 = vunpack.c.l.b16 %v422
        %v478 = vunpack.c.l.b16 %v423
        %v479 = vunpack.c.l.b16 %v424
        %v480 = vunpack.c.l.b16 %v425
        %v481 = vunpack.c.l.b16 %v426
        %v482 = vunpack.c.l.b16 %v427
        %v483 = vpack.c.b16 %v468, %v467
        %v484 = vpack.c.b16 %v470, %v469
        %v485 = vpack.c.b16 %v472, %v471
        %v486 = vpack.c.b16 %v474, %v473
        %v487 = vpack.c.b16 %v476, %v475
        %v488 = vpack.c.b16 %v478, %v477
        %v489 = vpack.c.b16 %v480, %v479
        %v490 = vpack.c.b16 %v482, %v481
        %v515 = vunpack.c.l.b16 %v428
        %v516 = vunpack.c.l.b16 %v429
        %v517 = vunpack.c.l.b16 %v430
        %v518 = vunpack.c.l.b16 %v431
        %v519 = vunpack.c.l.b16 %v432
        %v520 = vunpack.c.l.b16 %v433
        %v521 = vunpack.c.l.b16 %v434
        %v522 = vunpack.c.l.b16 %v435
        %v523 = vunpack.c.l.b16 %v436
        %v524 = vunpack.c.l.b16 %v437
        %v525 = vunpack.c.l.b16 %v438
        %v526 = vunpack.c.l.b16 %v439
        %v527 = vunpack.c.l.b16 %v440
        %v528 = vunpack.c.l.b16 %v441
        %v529 = vunpack.c.l.b16 %v442
        %v530 = vunpack.c.l.b16 %v443
        %v531 = vpack.c.b16 %v516, %v515
        %v532 = vpack.c.b16 %v518, %v517
        %v533 = vpack.c.b16 %v520, %v519
        %v534 = vpack.c.b16 %v522, %v521
        %v535 = vpack.c.b16 %v524, %v523
        %v536 = vpack.c.b16 %v526, %v525
        %v537 = vpack.c.b16 %v528, %v527
        %v538 = vpack.c.b16 %v530, %v529
        %547 = vmatprep.subr.bf16.mxu0 0
        %548 = vmatpush1.bf16.msra.mxu0 %v538
        %549 = vmatprep.subr.bf16.mxu0 0
        %550 = vmatpush1.bf16.msra.mxu0 %v537
        %551 = vmatprep.subr.bf16.mxu0 0
        %552 = vmatpush1.bf16.msra.mxu0 %v536
        %553 = vmatprep.subr.bf16.mxu0 0
        %554 = vmatpush1.bf16.msra.mxu0 %v535
        %555 = vmatprep.subr.bf16.mxu0 0
        %556 = vmatpush1.bf16.msra.mxu0 %v534
        %557 = vmatprep.subr.bf16.mxu0 0
        %558 = vmatpush1.bf16.msra.mxu0 %v533
        %559 = vmatprep.subr.bf16.mxu0 0
        %560 = vmatpush1.bf16.msra.mxu0 %v532
        %561 = vmatprep.subr.bf16.mxu0 0
        %562 = vmatpush1.bf16.msra.mxu0 %v531
        %563 = vmatprep.subr.bf16.mxu0 0
        %564 = vmatpush2.bf16.msra.mxu0 0
        %565 = vmatprep.subr.bf16.mxu0 0
        %566 = vmatpush2.bf16.msra.mxu0 0
        %567 = vmatprep.subr.bf16.mxu0 0
        %568 = vmatpush2.bf16.msra.mxu0 0
        %569 = vmatprep.subr.bf16.mxu0 0
        %570 = vmatpush2.bf16.msra.mxu0 0
        %571 = vmatprep.subr.bf16.mxu0 0
        %572 = vmatpush2.bf16.msra.mxu0 0
        %573 = vmatprep.subr.bf16.mxu0 0
        %574 = vmatpush2.bf16.msra.mxu0 0
        %575 = vmatprep.subr.bf16.mxu0 0
        %576 = vmatpush2.bf16.msra.mxu0 0
        %577 = vmatprep.subr.bf16.mxu0 0
        %578 = vmatpush2.bf16.msra.mxu0 0
        %579 = vmatprep.mubr.bf16.mxu0 0
        %580 = vmatmul.mubr.bf16.gmra.mxu0 %v483
        %v581 = vpop.f32.mrf.mxu0
        %v582 = vadd.f32 %v449, %v581
        %v583 = vpop.f32.mrf.mxu0
        %v584 = vpop.f32.mrf.mxu0
        %v585 = vadd.f32 %v449, %v584
        %v586 = vpop.f32.mrf.mxu0
        %587 = vmatprep.mubr.bf16.mxu0 0
        %588 = vmatmul.mubr.bf16.gmra.mxu0 %v484
        %v589 = vpop.f32.mrf.mxu0
        %v590 = vadd.f32 %v449, %v589
        %v591 = vpop.f32.mrf.mxu0
        %v592 = vpop.f32.mrf.mxu0
        %v593 = vadd.f32 %v449, %v592
        %v594 = vpop.f32.mrf.mxu0
        %595 = vmatprep.mubr.bf16.mxu0 0
        %596 = vmatmul.mubr.bf16.gmra.mxu0 %v485
        %v597 = vpop.f32.mrf.mxu0
        %v598 = vadd.f32 %v449, %v597
        %v599 = vpop.f32.mrf.mxu0
        %v600 = vpop.f32.mrf.mxu0
        %v601 = vadd.f32 %v449, %v600
        %v602 = vpop.f32.mrf.mxu0
        %603 = vmatprep.mubr.bf16.mxu0 0
        %604 = vmatmul.mubr.bf16.gmra.mxu0 %v486
        %v605 = vpop.f32.mrf.mxu0
        %v606 = vadd.f32 %v449, %v605
        %v607 = vpop.f32.mrf.mxu0
        %v608 = vpop.f32.mrf.mxu0
        %v609 = vadd.f32 %v449, %v608
        %v610 = vpop.f32.mrf.mxu0
        %611 = vmatprep.mubr.bf16.mxu0 0
        %612 = vmatmul.mubr.bf16.gmra.mxu0 %v487
        %v613 = vpop.f32.mrf.mxu0
        %v614 = vadd.f32 %v449, %v613
        %v615 = vpop.f32.mrf.mxu0
        %v616 = vpop.f32.mrf.mxu0
        %v617 = vadd.f32 %v449, %v616
        %v618 = vpop.f32.mrf.mxu0
        %619 = vmatprep.mubr.bf16.mxu0 0
        %620 = vmatmul.mubr.bf16.gmra.mxu0 %v488
        %v621 = vpop.f32.mrf.mxu0
        %v622 = vadd.f32 %v449, %v621
        %v623 = vpop.f32.mrf.mxu0
        %v624 = vpop.f32.mrf.mxu0
        %v625 = vadd.f32 %v449, %v624
        %v626 = vpop.f32.mrf.mxu0
        %627 = vmatprep.mubr.bf16.mxu0 0
        %628 = vmatmul.mubr.bf16.gmra.mxu0 %v489
        %v629 = vpop.f32.mrf.mxu0
        %v630 = vadd.f32 %v449, %v629
        %v631 = vpop.f32.mrf.mxu0
        %v632 = vpop.f32.mrf.mxu0
        %v633 = vadd.f32 %v449, %v632
        %v634 = vpop.f32.mrf.mxu0
        %635 = vmatprep.mubr.bf16.mxu0 0
        %636 = vmatmul.mubr.bf16.gmra.mxu0 %v490
        %v637 = vpop.f32.mrf.mxu0
        %v638 = vadd.f32 %v449, %v637
        %v639 = vpop.f32.mrf.mxu0
        %v640 = vpop.f32.mrf.mxu0
        %v641 = vadd.f32 %v449, %v640
        %v642 = vpop.f32.mrf.mxu0
        %643 = vdwg.mxu0
        %v644 = vmax.f32 %v582, 0.0
        %v645 = vmax.f32 %v585, 0.0
        %v646 = vmax.f32 %v590, 0.0
        %v647 = vmax.f32 %v593, 0.0
        %v648 = vmax.f32 %v598, 0.0
        %v649 = vmax.f32 %v601, 0.0
        %v650 = vmax.f32 %v606, 0.0
        %v651 = vmax.f32 %v609, 0.0
        %v652 = vmax.f32 %v614, 0.0
        %v653 = vmax.f32 %v617, 0.0
        %v654 = vmax.f32 %v622, 0.0
        %v655 = vmax.f32 %v625, 0.0
        %v656 = vmax.f32 %v630, 0.0
        %v657 = vmax.f32 %v633, 0.0
        %v658 = vmax.f32 %v638, 0.0
        %v659 = vmax.f32 %v641, 0.0
        %v660 = vpack.c.bf16 %v645, %v644
        %v661 = vpack.c.bf16 %v647, %v646
        %v662 = vpack.c.bf16 %v649, %v648
        %v663 = vpack.c.bf16 %v651, %v650
        %v664 = vpack.c.bf16 %v653, %v652
        %v665 = vpack.c.bf16 %v655, %v654
        %v666 = vpack.c.bf16 %v657, %v656
        %v667 = vpack.c.bf16 %v659, %v658
        %v668 = vld [vmem:[#allocation7] sm:$0xf]
        %v669 = vld [vmem:[#allocation7 + $0x4] sm:$0xf]
        %v670 = vld [vmem:[#allocation7 + $0x8] sm:$0xf]
        %v671 = vld [vmem:[#allocation7 + $0xc] sm:$0xf]
        %v672 = vld [vmem:[#allocation7 + $0x10] sm:$0xf]
        %v673 = vld [vmem:[#allocation7 + $0x14] sm:$0xf]
        %v674 = vld [vmem:[#allocation7 + $0x18] sm:$0xf]
        %v675 = vld [vmem:[#allocation7 + $0x1c] sm:$0xf]
        %v676 = vld [vmem:[#allocation7 + $0x20] sm:$0xf]
        %v677 = vld [vmem:[#allocation7 + $0x24] sm:$0xf]
        %v678 = vld [vmem:[#allocation7 + $0x28] sm:$0xf]
        %v679 = vld [vmem:[#allocation7 + $0x2c] sm:$0xf]
        %v680 = vld [vmem:[#allocation7 + $0x30] sm:$0xf]
        %v681 = vld [vmem:[#allocation7 + $0x34] sm:$0xf]
        %v682 = vld [vmem:[#allocation7 + $0x38] sm:$0xf]
        %v683 = vld [vmem:[#allocation7 + $0x3c] sm:$0xf]
        %v684 = vld [vmem:[%s4] sm:$0x1]
        %v686 = vlaneseq
        %v687 = vshrl.u32 %v686, 7
        %v688 = vsub.s32 0, %v687
        %v689 = vrot.slane %v684, %v688
        %v707 = vunpack.c.l.b16 %v668
        %v708 = vunpack.c.l.b16 %v669
        %v709 = vunpack.c.l.b16 %v670
        %v710 = vunpack.c.l.b16 %v671
        %v711 = vunpack.c.l.b16 %v672
        %v712 = vunpack.c.l.b16 %v673
        %v713 = vunpack.c.l.b16 %v674
        %v714 = vunpack.c.l.b16 %v675
        %v715 = vunpack.c.l.b16 %v676
        %v716 = vunpack.c.l.b16 %v677
        %v717 = vunpack.c.l.b16 %v678
        %v718 = vunpack.c.l.b16 %v679
        %v719 = vunpack.c.l.b16 %v680
        %v720 = vunpack.c.l.b16 %v681
        %v721 = vunpack.c.l.b16 %v682
        %v722 = vunpack.c.l.b16 %v683
        %v723 = vpack.c.b16 %v708, %v707
        %v724 = vpack.c.b16 %v710, %v709
        %v725 = vpack.c.b16 %v712, %v711
        %v726 = vpack.c.b16 %v714, %v713
        %v727 = vpack.c.b16 %v716, %v715
        %v728 = vpack.c.b16 %v718, %v717
        %v729 = vpack.c.b16 %v720, %v719
        %v730 = vpack.c.b16 %v722, %v721
        %739 = vmatprep.subr.bf16.mxu0 0
        %740 = vmatpush1.bf16.msra.mxu0 %v730
        %741 = vmatprep.subr.bf16.mxu0 0
        %742 = vmatpush1.bf16.msra.mxu0 %v729
        %743 = vmatprep.subr.bf16.mxu0 0
        %744 = vmatpush1.bf16.msra.mxu0 %v728
        %745 = vmatprep.subr.bf16.mxu0 0
        %746 = vmatpush1.bf16.msra.mxu0 %v727
        %747 = vmatprep.subr.bf16.mxu0 0
        %748 = vmatpush1.bf16.msra.mxu0 %v726
        %749 = vmatprep.subr.bf16.mxu0 0
        %750 = vmatpush1.bf16.msra.mxu0 %v725
        %751 = vmatprep.subr.bf16.mxu0 0
        %752 = vmatpush1.bf16.msra.mxu0 %v724
        %753 = vmatprep.subr.bf16.mxu0 0
        %754 = vmatpush1.bf16.msra.mxu0 %v723
        %755 = vmatprep.subr.bf16.mxu0 0
        %756 = vmatpush2.bf16.msra.mxu0 0
        %757 = vmatprep.subr.bf16.mxu0 0
        %758 = vmatpush2.bf16.msra.mxu0 0
        %759 = vmatprep.subr.bf16.mxu0 0
        %760 = vmatpush2.bf16.msra.mxu0 0
        %761 = vmatprep.subr.bf16.mxu0 0
        %762 = vmatpush2.bf16.msra.mxu0 0
        %763 = vmatprep.subr.bf16.mxu0 0
        %764 = vmatpush2.bf16.msra.mxu0 0
        %765 = vmatprep.subr.bf16.mxu0 0
        %766 = vmatpush2.bf16.msra.mxu0 0
        %767 = vmatprep.subr.bf16.mxu0 0
        %768 = vmatpush2.bf16.msra.mxu0 0
        %769 = vmatprep.subr.bf16.mxu0 0
        %770 = vmatpush2.bf16.msra.mxu0 0
        %771 = vmatprep.mubr.bf16.mxu0 0
        %772 = vmatmul.mubr.bf16.gmra.mxu0 %v660
        %v773 = vpop.f32.mrf.mxu0
        %v774 = vadd.f32 %v689, %v773
        %v775 = vpop.f32.mrf.mxu0
        %v776 = vpop.f32.mrf.mxu0
        %v777 = vadd.f32 %v689, %v776
        %v778 = vpop.f32.mrf.mxu0
        %779 = vmatprep.mubr.bf16.mxu0 0
        %780 = vmatmul.mubr.bf16.gmra.mxu0 %v661
        %v781 = vpop.f32.mrf.mxu0
        %v782 = vadd.f32 %v689, %v781
        %v783 = vpop.f32.mrf.mxu0
        %v784 = vpop.f32.mrf.mxu0
        %v785 = vadd.f32 %v689, %v784
        %v786 = vpop.f32.mrf.mxu0
        %787 = vmatprep.mubr.bf16.mxu0 0
        %788 = vmatmul.mubr.bf16.gmra.mxu0 %v662
        %v789 = vpop.f32.mrf.mxu0
        %v790 = vadd.f32 %v689, %v789
        %v791 = vpop.f32.mrf.mxu0
        %v792 = vpop.f32.mrf.mxu0
        %v793 = vadd.f32 %v689, %v792
        %v794 = vpop.f32.mrf.mxu0
        %795 = vmatprep.mubr.bf16.mxu0 0
        %796 = vmatmul.mubr.bf16.gmra.mxu0 %v663
        %v797 = vpop.f32.mrf.mxu0
        %v798 = vadd.f32 %v689, %v797
        %v799 = vpop.f32.mrf.mxu0
        %v800 = vpop.f32.mrf.mxu0
        %v801 = vadd.f32 %v689, %v800
        %v802 = vpop.f32.mrf.mxu0
        %803 = vmatprep.mubr.bf16.mxu0 0
        %804 = vmatmul.mubr.bf16.gmra.mxu0 %v664
        %v805 = vpop.f32.mrf.mxu0
        %v806 = vadd.f32 %v689, %v805
        %v807 = vpop.f32.mrf.mxu0
        %v808 = vpop.f32.mrf.mxu0
        %v809 = vadd.f32 %v689, %v808
        %v810 = vpop.f32.mrf.mxu0
        %811 = vmatprep.mubr.bf16.mxu0 0
        %812 = vmatmul.mubr.bf16.gmra.mxu0 %v665
        %v813 = vpop.f32.mrf.mxu0
        %v814 = vadd.f32 %v689, %v813
        %v815 = vpop.f32.mrf.mxu0
        %v816 = vpop.f32.mrf.mxu0
        %v817 = vadd.f32 %v689, %v816
        %v818 = vpop.f32.mrf.mxu0
        %819 = vmatprep.mubr.bf16.mxu0 0
        %820 = vmatmul.mubr.bf16.gmra.mxu0 %v666
        %v821 = vpop.f32.mrf.mxu0
        %v822 = vadd.f32 %v689, %v821
        %v823 = vpop.f32.mrf.mxu0
        %v824 = vpop.f32.mrf.mxu0
        %v825 = vadd.f32 %v689, %v824
        %v826 = vpop.f32.mrf.mxu0
        %827 = vmatprep.mubr.bf16.mxu0 0
        %828 = vmatmul.mubr.bf16.gmra.mxu0 %v667
        %v829 = vpop.f32.mrf.mxu0
        %v830 = vadd.f32 %v689, %v829
        %v831 = vpop.f32.mrf.mxu0
        %v832 = vpop.f32.mrf.mxu0
        %v833 = vadd.f32 %v689, %v832
        %v834 = vpop.f32.mrf.mxu0
        %835 = vdwg.mxu0
        %v836 = vmax.f32 %v774, 0.0
        %v837 = vmax.f32 %v777, 0.0
        %v838 = vmax.f32 %v782, 0.0
        %v839 = vmax.f32 %v785, 0.0
        %v840 = vmax.f32 %v790, 0.0
        %v841 = vmax.f32 %v793, 0.0
        %v842 = vmax.f32 %v798, 0.0
        %v843 = vmax.f32 %v801, 0.0
        %v844 = vmax.f32 %v806, 0.0
        %v845 = vmax.f32 %v809, 0.0
        %v846 = vmax.f32 %v814, 0.0
        %v847 = vmax.f32 %v817, 0.0
        %v848 = vmax.f32 %v822, 0.0
        %v849 = vmax.f32 %v825, 0.0
        %v850 = vmax.f32 %v830, 0.0
        %v851 = vmax.f32 %v833, 0.0
        %v852 = vpack.c.bf16 %v837, %v836
        %v853 = vpack.c.bf16 %v839, %v838
        %v854 = vpack.c.bf16 %v841, %v840
        %v855 = vpack.c.bf16 %v843, %v842
        %v856 = vpack.c.bf16 %v845, %v844
        %v857 = vpack.c.bf16 %v847, %v846
        %v858 = vpack.c.bf16 %v849, %v848
        %v859 = vpack.c.bf16 %v851, %v850
        %v860 = vld [vmem:[#allocation8] sm:$0xf]
        %v861 = vld [vmem:[#allocation8 + $0x4] sm:$0xf]
        %v862 = vld [vmem:[#allocation8 + $0x8] sm:$0xf]
        %v863 = vld [vmem:[#allocation8 + $0xc] sm:$0xf]
        %v864 = vld [vmem:[#allocation8 + $0x10] sm:$0xf]
        %v865 = vld [vmem:[#allocation8 + $0x14] sm:$0xf]
        %v866 = vld [vmem:[#allocation8 + $0x18] sm:$0xf]
        %v867 = vld [vmem:[#allocation8 + $0x1c] sm:$0xf]
        %v868 = vld [vmem:[#allocation8 + $0x20] sm:$0xf]
        %v869 = vld [vmem:[#allocation8 + $0x24] sm:$0xf]
        %v870 = vld [vmem:[#allocation8 + $0x28] sm:$0xf]
        %v871 = vld [vmem:[#allocation8 + $0x2c] sm:$0xf]
        %v872 = vld [vmem:[#allocation8 + $0x30] sm:$0xf]
        %v873 = vld [vmem:[#allocation8 + $0x34] sm:$0xf]
        %v874 = vld [vmem:[#allocation8 + $0x38] sm:$0xf]
        %v875 = vld [vmem:[#allocation8 + $0x3c] sm:$0xf]
        %v876 = vld [vmem:[%s6] sm:$0x1]
        %v878 = vlaneseq
        %v879 = vshrl.u32 %v878, 7
        %v880 = vsub.s32 0, %v879
        %v881 = vrot.slane %v876, %v880
        %v899 = vunpack.c.l.b16 %v860
        %v900 = vunpack.c.l.b16 %v861
        %v901 = vunpack.c.l.b16 %v862
        %v902 = vunpack.c.l.b16 %v863
        %v903 = vunpack.c.l.b16 %v864
        %v904 = vunpack.c.l.b16 %v865
        %v905 = vunpack.c.l.b16 %v866
        %v906 = vunpack.c.l.b16 %v867
        %v907 = vunpack.c.l.b16 %v868
        %v908 = vunpack.c.l.b16 %v869
        %v909 = vunpack.c.l.b16 %v870
        %v910 = vunpack.c.l.b16 %v871
        %v911 = vunpack.c.l.b16 %v872
        %v912 = vunpack.c.l.b16 %v873
        %v913 = vunpack.c.l.b16 %v874
        %v914 = vunpack.c.l.b16 %v875
        %v915 = vpack.c.b16 %v900, %v899
        %v916 = vpack.c.b16 %v902, %v901
        %v917 = vpack.c.b16 %v904, %v903
        %v918 = vpack.c.b16 %v906, %v905
        %v919 = vpack.c.b16 %v908, %v907
        %v920 = vpack.c.b16 %v910, %v909
        %v921 = vpack.c.b16 %v912, %v911
        %v922 = vpack.c.b16 %v914, %v913
        %931 = vmatprep.subr.bf16.mxu0 0
        %932 = vmatpush1.bf16.msra.mxu0 %v922
        %933 = vmatprep.subr.bf16.mxu0 0
        %934 = vmatpush1.bf16.msra.mxu0 %v921
        %935 = vmatprep.subr.bf16.mxu0 0
        %936 = vmatpush1.bf16.msra.mxu0 %v920
        %937 = vmatprep.subr.bf16.mxu0 0
        %938 = vmatpush1.bf16.msra.mxu0 %v919
        %939 = vmatprep.subr.bf16.mxu0 0
        %940 = vmatpush1.bf16.msra.mxu0 %v918
        %941 = vmatprep.subr.bf16.mxu0 0
        %942 = vmatpush1.bf16.msra.mxu0 %v917
        %943 = vmatprep.subr.bf16.mxu0 0
        %944 = vmatpush1.bf16.msra.mxu0 %v916
        %945 = vmatprep.subr.bf16.mxu0 0
        %946 = vmatpush1.bf16.msra.mxu0 %v915
        %947 = vmatprep.subr.bf16.mxu0 0
        %948 = vmatpush2.bf16.msra.mxu0 0
        %949 = vmatprep.subr.bf16.mxu0 0
        %950 = vmatpush2.bf16.msra.mxu0 0
        %951 = vmatprep.subr.bf16.mxu0 0
        %952 = vmatpush2.bf16.msra.mxu0 0
        %953 = vmatprep.subr.bf16.mxu0 0
        %954 = vmatpush2.bf16.msra.mxu0 0
        %955 = vmatprep.subr.bf16.mxu0 0
        %956 = vmatpush2.bf16.msra.mxu0 0
        %957 = vmatprep.subr.bf16.mxu0 0
        %958 = vmatpush2.bf16.msra.mxu0 0
        %959 = vmatprep.subr.bf16.mxu0 0
        %960 = vmatpush2.bf16.msra.mxu0 0
        %961 = vmatprep.subr.bf16.mxu0 0
        %962 = vmatpush2.bf16.msra.mxu0 0
        %963 = vmatprep.mubr.bf16.mxu0 0
        %964 = vmatmul.mubr.bf16.gmra.mxu0 %v852
        %v965 = vpop.f32.mrf.mxu0
        %v966 = vadd.f32 %v881, %v965
        %v967 = vpop.f32.mrf.mxu0
        %v968 = vpop.f32.mrf.mxu0
        %v969 = vadd.f32 %v881, %v968
        %v970 = vpop.f32.mrf.mxu0
        %971 = vmatprep.mubr.bf16.mxu0 0
        %972 = vmatmul.mubr.bf16.gmra.mxu0 %v853
        %v973 = vpop.f32.mrf.mxu0
        %v974 = vadd.f32 %v881, %v973
        %v975 = vpop.f32.mrf.mxu0
        %v976 = vpop.f32.mrf.mxu0
        %v977 = vadd.f32 %v881, %v976
        %v978 = vpop.f32.mrf.mxu0
        %979 = vmatprep.mubr.bf16.mxu0 0
        %980 = vmatmul.mubr.bf16.gmra.mxu0 %v854
        %v981 = vpop.f32.mrf.mxu0
        %v982 = vadd.f32 %v881, %v981
        %v983 = vpop.f32.mrf.mxu0
        %v984 = vpop.f32.mrf.mxu0
        %v985 = vadd.f32 %v881, %v984
        %v986 = vpop.f32.mrf.mxu0
        %987 = vmatprep.mubr.bf16.mxu0 0
        %988 = vmatmul.mubr.bf16.gmra.mxu0 %v855
        %v989 = vpop.f32.mrf.mxu0
        %v990 = vadd.f32 %v881, %v989
        %v991 = vpop.f32.mrf.mxu0
        %v992 = vpop.f32.mrf.mxu0
        %v993 = vadd.f32 %v881, %v992
        %v994 = vpop.f32.mrf.mxu0
        %995 = vmatprep.mubr.bf16.mxu0 0
        %996 = vmatmul.mubr.bf16.gmra.mxu0 %v856
        %v997 = vpop.f32.mrf.mxu0
        %v998 = vadd.f32 %v881, %v997
        %v999 = vpop.f32.mrf.mxu0
        %v1000 = vpop.f32.mrf.mxu0
        %v1001 = vadd.f32 %v881, %v1000
        %v1002 = vpop.f32.mrf.mxu0
        %1003 = vmatprep.mubr.bf16.mxu0 0
        %1004 = vmatmul.mubr.bf16.gmra.mxu0 %v857
        %v1005 = vpop.f32.mrf.mxu0
        %v1006 = vadd.f32 %v881, %v1005
        %v1007 = vpop.f32.mrf.mxu0
        %v1008 = vpop.f32.mrf.mxu0
        %v1009 = vadd.f32 %v881, %v1008
        %v1010 = vpop.f32.mrf.mxu0
        %1011 = vmatprep.mubr.bf16.mxu0 0
        %1012 = vmatmul.mubr.bf16.gmra.mxu0 %v858
        %v1013 = vpop.f32.mrf.mxu0
        %v1014 = vadd.f32 %v881, %v1013
        %v1015 = vpop.f32.mrf.mxu0
        %v1016 = vpop.f32.mrf.mxu0
        %v1017 = vadd.f32 %v881, %v1016
        %v1018 = vpop.f32.mrf.mxu0
        %1019 = vmatprep.mubr.bf16.mxu0 0
        %1020 = vmatmul.mubr.bf16.gmra.mxu0 %v859
        %v1021 = vpop.f32.mrf.mxu0
        %v1022 = vadd.f32 %v881, %v1021
        %v1023 = vpop.f32.mrf.mxu0
        %v1024 = vpop.f32.mrf.mxu0
        %v1025 = vadd.f32 %v881, %v1024
        %v1026 = vpop.f32.mrf.mxu0
        %1027 = vdwg.mxu0
        %v1028 = vmax.f32 %v966, 0.0
        %v1029 = vmax.f32 %v969, 0.0
        %v1030 = vmax.f32 %v974, 0.0
        %v1031 = vmax.f32 %v977, 0.0
        %v1032 = vmax.f32 %v982, 0.0
        %v1033 = vmax.f32 %v985, 0.0
        %v1034 = vmax.f32 %v990, 0.0
        %v1035 = vmax.f32 %v993, 0.0
        %v1036 = vmax.f32 %v998, 0.0
        %v1037 = vmax.f32 %v1001, 0.0
        %v1038 = vmax.f32 %v1006, 0.0
        %v1039 = vmax.f32 %v1009, 0.0
        %v1040 = vmax.f32 %v1014, 0.0
        %v1041 = vmax.f32 %v1017, 0.0
        %v1042 = vmax.f32 %v1022, 0.0
        %v1043 = vmax.f32 %v1025, 0.0
        %v1044 = vpack.c.bf16 %v1029, %v1028
        %v1045 = vpack.c.bf16 %v1031, %v1030
        %v1046 = vpack.c.bf16 %v1033, %v1032
        %v1047 = vpack.c.bf16 %v1035, %v1034
        %v1048 = vpack.c.bf16 %v1037, %v1036
        %v1049 = vpack.c.bf16 %v1039, %v1038
        %v1050 = vpack.c.bf16 %v1041, %v1040
        %v1051 = vpack.c.bf16 %v1043, %v1042
        %v1052 = vld [vmem:[#allocation10] sm:$0xf]
        %v1053 = vld [vmem:[#allocation10 + $0x4] sm:$0xf]
        %v1054 = vld [vmem:[#allocation10 + $0x8] sm:$0xf]
        %v1055 = vld [vmem:[#allocation10 + $0xc] sm:$0xf]
        %v1056 = vld [vmem:[#allocation10 + $0x10] sm:$0xf]
        %v1057 = vld [vmem:[#allocation10 + $0x14] sm:$0xf]
        %v1058 = vld [vmem:[#allocation10 + $0x18] sm:$0xf]
        %v1059 = vld [vmem:[#allocation10 + $0x1c] sm:$0xf]
        %v1060 = vld [vmem:[#allocation10 + $0x20] sm:$0xf]
        %v1061 = vld [vmem:[#allocation10 + $0x24] sm:$0xf]
        %v1062 = vld [vmem:[#allocation10 + $0x28] sm:$0xf]
        %v1063 = vld [vmem:[#allocation10 + $0x2c] sm:$0xf]
        %v1064 = vld [vmem:[#allocation10 + $0x30] sm:$0xf]
        %v1065 = vld [vmem:[#allocation10 + $0x34] sm:$0xf]
        %v1066 = vld [vmem:[#allocation10 + $0x38] sm:$0xf]
        %v1067 = vld [vmem:[#allocation10 + $0x3c] sm:$0xf]
        %v1068 = vld [vmem:[%s8] sm:$0x1]
        %v1070 = vlaneseq
        %v1071 = vshrl.u32 %v1070, 7
        %v1072 = vsub.s32 0, %v1071
        %v1073 = vrot.slane %v1068, %v1072
        %v1091 = vunpack.c.l.b16 %v1052
        %v1092 = vunpack.c.l.b16 %v1053
        %v1093 = vunpack.c.l.b16 %v1054
        %v1094 = vunpack.c.l.b16 %v1055
        %v1095 = vunpack.c.l.b16 %v1056
        %v1096 = vunpack.c.l.b16 %v1057
        %v1097 = vunpack.c.l.b16 %v1058
        %v1098 = vunpack.c.l.b16 %v1059
        %v1099 = vunpack.c.l.b16 %v1060
        %v1100 = vunpack.c.l.b16 %v1061
        %v1101 = vunpack.c.l.b16 %v1062
        %v1102 = vunpack.c.l.b16 %v1063
        %v1103 = vunpack.c.l.b16 %v1064
        %v1104 = vunpack.c.l.b16 %v1065
        %v1105 = vunpack.c.l.b16 %v1066
        %v1106 = vunpack.c.l.b16 %v1067
        %v1107 = vpack.c.b16 %v1092, %v1091
        %v1108 = vpack.c.b16 %v1094, %v1093
        %v1109 = vpack.c.b16 %v1096, %v1095
        %v1110 = vpack.c.b16 %v1098, %v1097
        %v1111 = vpack.c.b16 %v1100, %v1099
        %v1112 = vpack.c.b16 %v1102, %v1101
        %v1113 = vpack.c.b16 %v1104, %v1103
        %v1114 = vpack.c.b16 %v1106, %v1105
        %1123 = vmatprep.subr.bf16.mxu0 0
        %1124 = vmatpush1.bf16.msra.mxu0 %v1114
        %1125 = vmatprep.subr.bf16.mxu0 0
        %1126 = vmatpush1.bf16.msra.mxu0 %v1113
        %1127 = vmatprep.subr.bf16.mxu0 0
        %1128 = vmatpush1.bf16.msra.mxu0 %v1112
        %1129 = vmatprep.subr.bf16.mxu0 0
        %1130 = vmatpush1.bf16.msra.mxu0 %v1111
        %1131 = vmatprep.subr.bf16.mxu0 0
        %1132 = vmatpush1.bf16.msra.mxu0 %v1110
        %1133 = vmatprep.subr.bf16.mxu0 0
        %1134 = vmatpush1.bf16.msra.mxu0 %v1109
        %1135 = vmatprep.subr.bf16.mxu0 0
        %1136 = vmatpush1.bf16.msra.mxu0 %v1108
        %1137 = vmatprep.subr.bf16.mxu0 0
        %1138 = vmatpush1.bf16.msra.mxu0 %v1107
        %1139 = vmatprep.subr.bf16.mxu0 0
        %1140 = vmatpush2.bf16.msra.mxu0 0
        %1141 = vmatprep.subr.bf16.mxu0 0
        %1142 = vmatpush2.bf16.msra.mxu0 0
        %1143 = vmatprep.subr.bf16.mxu0 0
        %1144 = vmatpush2.bf16.msra.mxu0 0
        %1145 = vmatprep.subr.bf16.mxu0 0
        %1146 = vmatpush2.bf16.msra.mxu0 0
        %1147 = vmatprep.subr.bf16.mxu0 0
        %1148 = vmatpush2.bf16.msra.mxu0 0
        %1149 = vmatprep.subr.bf16.mxu0 0
        %1150 = vmatpush2.bf16.msra.mxu0 0
        %1151 = vmatprep.subr.bf16.mxu0 0
        %1152 = vmatpush2.bf16.msra.mxu0 0
        %1153 = vmatprep.subr.bf16.mxu0 0
        %1154 = vmatpush2.bf16.msra.mxu0 0
        %1155 = vmatprep.mubr.bf16.mxu0 0
        %1156 = vmatmul.mubr.bf16.gmra.mxu0 %v1044
        %v1157 = vpop.f32.mrf.mxu0
        %v1158 = vadd.f32 %v1073, %v1157
        %v1159 = vpop.f32.mrf.mxu0
        %v1160 = vpop.f32.mrf.mxu0
        %v1161 = vadd.f32 %v1073, %v1160
        %v1162 = vpop.f32.mrf.mxu0
        %1163 = vmatprep.mubr.bf16.mxu0 0
        %1164 = vmatmul.mubr.bf16.gmra.mxu0 %v1045
        %v1165 = vpop.f32.mrf.mxu0
        %v1166 = vadd.f32 %v1073, %v1165
        %v1167 = vpop.f32.mrf.mxu0
        %v1168 = vpop.f32.mrf.mxu0
        %v1169 = vadd.f32 %v1073, %v1168
        %v1170 = vpop.f32.mrf.mxu0
        %1171 = vmatprep.mubr.bf16.mxu0 0
        %1172 = vmatmul.mubr.bf16.gmra.mxu0 %v1046
        %v1173 = vpop.f32.mrf.mxu0
        %v1174 = vadd.f32 %v1073, %v1173
        %v1175 = vpop.f32.mrf.mxu0
        %v1176 = vpop.f32.mrf.mxu0
        %v1177 = vadd.f32 %v1073, %v1176
        %v1178 = vpop.f32.mrf.mxu0
        %1179 = vmatprep.mubr.bf16.mxu0 0
        %1180 = vmatmul.mubr.bf16.gmra.mxu0 %v1047
        %v1181 = vpop.f32.mrf.mxu0
        %v1182 = vadd.f32 %v1073, %v1181
        %v1183 = vpop.f32.mrf.mxu0
        %v1184 = vpop.f32.mrf.mxu0
        %v1185 = vadd.f32 %v1073, %v1184
        %v1186 = vpop.f32.mrf.mxu0
        %1187 = vmatprep.mubr.bf16.mxu0 0
        %1188 = vmatmul.mubr.bf16.gmra.mxu0 %v1048
        %v1189 = vpop.f32.mrf.mxu0
        %v1190 = vadd.f32 %v1073, %v1189
        %v1191 = vpop.f32.mrf.mxu0
        %v1192 = vpop.f32.mrf.mxu0
        %v1193 = vadd.f32 %v1073, %v1192
        %v1194 = vpop.f32.mrf.mxu0
        %1195 = vmatprep.mubr.bf16.mxu0 0
        %1196 = vmatmul.mubr.bf16.gmra.mxu0 %v1049
        %v1197 = vpop.f32.mrf.mxu0
        %v1198 = vadd.f32 %v1073, %v1197
        %v1199 = vpop.f32.mrf.mxu0
        %v1200 = vpop.f32.mrf.mxu0
        %v1201 = vadd.f32 %v1073, %v1200
        %v1202 = vpop.f32.mrf.mxu0
        %1203 = vmatprep.mubr.bf16.mxu0 0
        %1204 = vmatmul.mubr.bf16.gmra.mxu0 %v1050
        %v1205 = vpop.f32.mrf.mxu0
        %v1206 = vadd.f32 %v1073, %v1205
        %v1207 = vpop.f32.mrf.mxu0
        %v1208 = vpop.f32.mrf.mxu0
        %v1209 = vadd.f32 %v1073, %v1208
        %v1210 = vpop.f32.mrf.mxu0
        %1211 = vmatprep.mubr.bf16.mxu0 0
        %1212 = vmatmul.mubr.bf16.gmra.mxu0 %v1051
        %v1213 = vpop.f32.mrf.mxu0
        %v1214 = vadd.f32 %v1073, %v1213
        %v1215 = vpop.f32.mrf.mxu0
        %v1216 = vpop.f32.mrf.mxu0
        %v1217 = vadd.f32 %v1073, %v1216
        %v1218 = vpop.f32.mrf.mxu0
        %1219 = vdwg.mxu0
        %1220 = vst [vmem:[%s408] sm:$0xff] %v1158
        %1221 = vst [vmem:[%s408 + $0x8] sm:$0xff] %v1161
        %1222 = vst [vmem:[%s408 + $0x10] sm:$0xff] %v1166
        %1223 = vst [vmem:[%s408 + $0x18] sm:$0xff] %v1169
        %1224 = vst [vmem:[%s408 + $0x20] sm:$0xff] %v1174
        %1225 = vst [vmem:[%s408 + $0x28] sm:$0xff] %v1177
        %1226 = vst [vmem:[%s408 + $0x30] sm:$0xff] %v1182
        %1227 = vst [vmem:[%s408 + $0x38] sm:$0xff] %v1185
        %1228 = vst [vmem:[%s408 + $0x40] sm:$0xff] %v1190
        %1229 = vst [vmem:[%s408 + $0x48] sm:$0xff] %v1193
        %1230 = vst [vmem:[%s408 + $0x50] sm:$0xff] %v1198
        %1231 = vst [vmem:[%s408 + $0x58] sm:$0xff] %v1201
        %1232 = vst [vmem:[%s408 + $0x60] sm:$0xff] %v1206
        %1233 = vst [vmem:[%s408 + $0x68] sm:$0xff] %v1209
        %1234 = vst [vmem:[%s408 + $0x70] sm:$0xff] %v1214
        %1235 = vst [vmem:[%s408 + $0x78] sm:$0xff] %v1217
        %s1236 = sand.u32 %s230, 1
        %s1237 = scalar_lea.sflag [#allocation4], %s1236
        %s1238 = sand.u32 %s230, 1
        %s1239 = smul.addr %s1238, 128
        %s1240 = scalar_lea.vmem [#allocation11], %s1239
        // Predicated region
        $region77: #{tpu_custom_call.1} parent=55 // pred_check
          %p1241 = pneg %p240
        $region78: #{tpu_custom_call.1} parent=55 // pred_check_branch
          %1243 = sbr.rel (%p1241) target = $region80
        $region79: #{tpu_custom_call.1} parent=55 // pred_region
          %s1244 = smul.u32 16, %s28
          %s1246 = ssub.s32 2048, 2048
          %1247 = vsyncadd %s1237, %s1246
          %s1248 = smul.addr %s1244, 128
          %s1249 = scalar_lea.hbm %s9, %s1248
          %s1250 = sshll.u32 %s1240, 4
          %s1251 = int_to_ptr.vmem [resolvable:$true] %s1250
          %1256 = dma.vmem_to_hbm [thread:$0]  %s1251, 2048, %s1249, %s1237, 128, 128, 8
        $region80: #{tpu_custom_call.1} parent=55 // pred_fallthru
          _
      $region56: #{tpu_custom_call.1} parent=5 // pred_fallthru
        _
      %p1257 = scmp.le.s32.totalorder 2, %s23
      // Predicated region
      $region81: #{tpu_custom_call.1} parent=5 // pred_check
        %p1258 = pneg %p1257
      $region82: #{tpu_custom_call.1} parent=5 // pred_check_branch
        %1260 = sbr.rel (%p1258) target = $region84
      $region83: #{tpu_custom_call.1} parent=5 // pred_region
        %s1261 = ssub.s32 %s23, 2
        // Predicated region
        $region85: #{tpu_custom_call.1} parent=83 // pred_check
          %p1262 = pneg %p246
        $region86: #{tpu_custom_call.1} parent=83 // pred_check_branch
          %1264 = sbr.rel (%p1262) target = $region88
        $region87: #{tpu_custom_call.1} parent=83 // pred_region
          %s1265 = sand.u32 %s231, 1
          %s1266 = scalar_lea.sflag [#allocation4], %s1265
          %s1267 = sand.u32 %s231, 1
          %s1268 = smul.addr %s1267, 128
          %s1269 = scalar_lea.vmem [#allocation11], %s1268
          %1270 = dma.done %s1266, 2048
        $region88: #{tpu_custom_call.1} parent=83 // pred_fallthru
          _
      $region84: #{tpu_custom_call.1} parent=5 // pred_fallthru
        _
    $region6: #{tpu_custom_call.1} parent=1 // loop_footer
      %s27 = sadd.s32 1, %s23
    $region7: #{tpu_custom_call.1} parent=1 // loop_footer_branch
      %22 = sbr.rel target = $region3
    $region8: #{tpu_custom_call.1} parent=1 // loop_exit
      _
    %1271 = vsyncpa [#allocation3], 1
    %s1272 = scalar_lea.sflag [#allocation3], 1
    %1273 = vsyncpa %s1272, 1
    %1274 = vsyncpa [#allocation6], 1
    %1275 = vsyncpa [#allocation9], 1
    %1276 = vsyncpa [#allocation4], 1
    %s1277 = scalar_lea.sflag [#allocation4], 1
    %1278 = vsyncpa %s1277, 1

</llo_original>
